<compile_context>
chip_gen: v7x
topology: tpu7x:2x2x1
jax: 0.10.0
libtpu: 0.0.40
codegen_flags: <defaults>
</compile_context>

<pallas_src>
import math
import functools

import jax
import jax.numpy as jnp
from jax import lax
from jax.experimental import pallas as pl
from jax.experimental.pallas import tpu as pltpu

_LANE = 128
_MIB = 1024 * 1024


def _round_up(x, m):
    return ((x + m - 1) // m) * m


# ---------------------------------------------------------------------------
# Pass 1: fused Q/K/V affine projections + ReLU (once per token, bf16 outputs)
# ---------------------------------------------------------------------------
def _project_kernel(q_ref, k_ref, v_ref,
                    wq_w, bq_b, wk_w, bk_b, wv_w, bv_b,
                    wq_o, wk_o, wv_o):
    def affine_relu(x_ref, w_ref, b_ref):
        y = jnp.dot(x_ref[...], w_ref[...], preferred_element_type=jnp.float32)
        return jnp.maximum(y + b_ref[...], 0.0)

    wq_o[...] = affine_relu(q_ref, wq_w, bq_b).astype(wq_o.dtype)
    wk_o[...] = affine_relu(k_ref, wk_w, bk_b).astype(wk_o.dtype)
    wv_o[...] = affine_relu(v_ref, wv_w, bv_b).astype(wv_o.dtype)


# ---------------------------------------------------------------------------
# Pass 2: flash-style online-softmax attention over pre-projected bf16 tiles
# ---------------------------------------------------------------------------
def _flash_kernel(mask_kv, l_valid, tk,
                  wq_ref, wk_ref, wv_ref, o_ref,
                  m_sc, l_sc, acc_sc):
    ki = pl.program_id(2)

    @pl.when(ki == 0)
    def _init():
        m_sc[...] = jnp.full_like(m_sc, -jnp.inf)
        l_sc[...] = jnp.zeros_like(l_sc)
        acc_sc[...] = jnp.zeros_like(acc_sc)

    # wq is pre-scaled by 1/sqrt(d_inp) (folded into Wq/bq in the wrapper), so
    # no per-step score scaling is needed.  Contract the last dims of both
    # operands (no explicit .T).
    s = lax.dot_general(
        wq_ref[...], wk_ref[...],
        dimension_numbers=(((1,), (1,)), ((), ())),
        preferred_element_type=jnp.float32)

    if mask_kv:  # static python bool: only emitted when the kv length was padded
        col = ki * tk + lax.broadcasted_iota(jnp.int32, s.shape, 1)
        s = jnp.where(col < l_valid, s, -1e30)

    # Online softmax update (f32 bookkeeping).
    m_prev = m_sc[...]
    m_new = jnp.maximum(m_prev, jnp.max(s, axis=-1, keepdims=True))
    alpha = jnp.exp(m_prev - m_new)
    p = jnp.exp(s - m_new)
    l_sc[...] = alpha * l_sc[...] + jnp.sum(p, axis=-1, keepdims=True)
    acc_sc[...] = alpha * acc_sc[...] + jnp.dot(
        p.astype(jnp.bfloat16), wv_ref[...], preferred_element_type=jnp.float32)
    m_sc[...] = m_new

    @pl.when(ki == pl.num_programs(2) - 1)
    def _finalize():
        o_ref[...] = (acc_sc[...] * pl.reciprocal(l_sc[...], approx=True)
                      ).astype(o_ref.dtype)


def attention_pallas(query, key, value, params, *, tile_pref=256):
    """query/key/value: [B, L, d_inp] float32. params: dict of Wq,bq,Wk,bk,Wv,bv."""
    B, L, d_inp = query.shape
    d_q = params["Wq"].shape[1]
    d_k = params["Wk"].shape[1]
    d_v = params["Wv"].shape[1]
    assert d_q == d_k, "d_q must equal d_k for the score matmul"

    # Reference divides by sqrt(key.size(-1)) == sqrt(d_inp) (pre-projection dim).
    scale = 1.0 / math.sqrt(float(d_inp))

    # Zero-pad projection output dims to a lane multiple (mathematically inert).
    d_qk_pad = _round_up(max(d_q, 1), _LANE)
    d_v_pad = _round_up(max(d_v, 1), _LANE)

    # ---- tile selection & sequence padding ---------------------------------
    if L > tile_pref:
        t = tile_pref            # multiple of 128 (lane-dense tk) and of 16
    else:
        t = _round_up(L, 16)     # single tile; 16 sublanes for bf16 packing
    tq = tk = t

    def flash_vmem_bytes(tq_, tk_):
        dbl = 2  # BlockSpec double buffering
        b = dbl * (tq_ * d_qk_pad * 2 + tk_ * d_qk_pad * 2 + tk_ * d_v_pad * 2)
        b += dbl * tq_ * d_v_pad * 4                     # f32 output tile
        b += 2 * tq_ * 4 + tq_ * d_v_pad * 4             # m, l, acc scratch
        b += 2 * tq_ * tk_ * 4                           # s, p temporaries
        return b

    # Auto-shrink tq/tk when the footprint would overshoot a conservative,
    # cross-generation budget (v7x scoped default is 32 MiB / physical 64 MiB).
    if L > tile_pref:
        while flash_vmem_bytes(tq, tk) > 24 * _MIB and min(tq, tk) > 128:
            if tk >= tq:
                tk //= 2
            else:
                tq //= 2
    tr = tq                      # pass-1 row tile (divides L_pad by construction)

    L_pad = _round_up(L, t)
    mask_kv = (L_pad != L)

    def pad_rows(x):
        if L_pad == L:
            return x
        return jnp.pad(x, ((0, 0), (0, L_pad - L), (0, 0)))

    # bf16 MXU operands; accumulation stays f32 inside the kernels.
    qx = pad_rows(query).astype(jnp.bfloat16)
    kx = pad_rows(key).astype(jnp.bfloat16)
    vx = pad_rows(value).astype(jnp.bfloat16)

    def pad_wb(W, b, d_pad, s=1.0):
        extra = d_pad - W.shape[1]
        Wp = jnp.pad(W * s, ((0, 0), (0, extra))).astype(jnp.bfloat16)
        bp = jnp.pad(b * s, (0, extra)).reshape(1, d_pad).astype(jnp.float32)
        return Wp, bp

    # Fold the softmax scale into the query projection (ReLU is positively
    # homogeneous, scale > 0): relu(x@(s*Wq) + s*bq) == s * relu(x@Wq + bq).
    Wq, bq = pad_wb(params["Wq"], params["bq"], d_qk_pad, s=scale)
    Wk, bk = pad_wb(params["Wk"], params["bk"], d_qk_pad)
    Wv, bv = pad_wb(params["Wv"], params["bv"], d_v_pad)

    # ------------------------- pass 1: projections --------------------------
    nr = L_pad // tr
    proj_flops = 2 * B * L_pad * d_inp * (2 * d_qk_pad + d_v_pad)
    proj_bytes = (3 * B * L_pad * d_inp * 2
                  + d_inp * (2 * d_qk_pad + d_v_pad) * 2
                  + (2 * d_qk_pad + d_v_pad) * 4
                  + B * L_pad * (2 * d_qk_pad + d_v_pad) * 2)
    proj_vmem = 2 * (3 * tr * d_inp * 2
                     + d_inp * (2 * d_qk_pad + d_v_pad) * 2
                     + (2 * d_qk_pad + d_v_pad) * 4
                     + tr * (2 * d_qk_pad + d_v_pad) * 2)

    wq_a, wk_a, wv_a = pl.pallas_call(
        _project_kernel,
        out_shape=(
            jax.ShapeDtypeStruct((B, L_pad, d_qk_pad), jnp.bfloat16),
            jax.ShapeDtypeStruct((B, L_pad, d_qk_pad), jnp.bfloat16),
            jax.ShapeDtypeStruct((B, L_pad, d_v_pad), jnp.bfloat16),
        ),
        grid_spec=pltpu.PrefetchScalarGridSpec(
            num_scalar_prefetch=0,
            grid=(B, nr),
            in_specs=[
                pl.BlockSpec((None, tr, d_inp), lambda b, r: (b, r, 0)),   # query
                pl.BlockSpec((None, tr, d_inp), lambda b, r: (b, r, 0)),   # key
                pl.BlockSpec((None, tr, d_inp), lambda b, r: (b, r, 0)),   # value
                pl.BlockSpec((d_inp, d_qk_pad), lambda b, r: (0, 0)),      # Wq (pre-scaled)
                pl.BlockSpec((1, d_qk_pad), lambda b, r: (0, 0)),          # bq (pre-scaled)
                pl.BlockSpec((d_inp, d_qk_pad), lambda b, r: (0, 0)),      # Wk
                pl.BlockSpec((1, d_qk_pad), lambda b, r: (0, 0)),          # bk
                pl.BlockSpec((d_inp, d_v_pad), lambda b, r: (0, 0)),       # Wv
                pl.BlockSpec((1, d_v_pad), lambda b, r: (0, 0)),           # bv
            ],
            out_specs=[
                pl.BlockSpec((None, tr, d_qk_pad), lambda b, r: (b, r, 0)),
                pl.BlockSpec((None, tr, d_qk_pad), lambda b, r: (b, r, 0)),
                pl.BlockSpec((None, tr, d_v_pad), lambda b, r: (b, r, 0)),
            ],
        ),
        compiler_params=pltpu.CompilerParams(
            dimension_semantics=("parallel", "parallel"),
            vmem_limit_bytes=int(min(64 * _MIB, max(32 * _MIB, 2 * proj_vmem)))),
        cost_estimate=pl.CostEstimate(
            flops=int(proj_flops), transcendentals=0,
            bytes_accessed=int(proj_bytes)),
    )(qx, kx, vx, Wq, bq, Wk, bk, Wv, bv)

    # ------------------------- pass 2: flash attention ----------------------
    nq = L_pad // tq
    nk = L_pad // tk

    flash_flops = 2 * B * L_pad * L_pad * (d_qk_pad + d_v_pad)
    flash_trans = B * L_pad * L_pad
    flash_bytes = (B * L_pad * d_qk_pad * 2
                   + B * nq * L_pad * (d_qk_pad + d_v_pad) * 2
                   + B * L_pad * d_v_pad * 4)

    kernel = functools.partial(_flash_kernel, mask_kv, L, tk)

    out_padded = pl.pallas_call(
        kernel,
        out_shape=jax.ShapeDtypeStruct((B, L_pad, d_v_pad), query.dtype),
        grid_spec=pltpu.PrefetchScalarGridSpec(
            num_scalar_prefetch=0,
            grid=(B, nq, nk),
            in_specs=[
                pl.BlockSpec((None, tq, d_qk_pad), lambda b, qi, ki: (b, qi, 0)),  # wq
                pl.BlockSpec((None, tk, d_qk_pad), lambda b, qi, ki: (b, ki, 0)),  # wk
                pl.BlockSpec((None, tk, d_v_pad), lambda b, qi, ki: (b, ki, 0)),   # wv
            ],
            out_specs=pl.BlockSpec((None, tq, d_v_pad),
                                   lambda b, qi, ki: (b, qi, 0)),
            scratch_shapes=[
                pltpu.VMEM((tq, 1), jnp.float32),          # running max
                pltpu.VMEM((tq, 1), jnp.float32),          # running denom
                pltpu.VMEM((tq, d_v_pad), jnp.float32),    # output accumulator
            ],
        ),
        compiler_params=pltpu.CompilerParams(
            dimension_semantics=("parallel", "parallel", "arbitrary"),
            vmem_limit_bytes=int(min(64 * _MIB,
                                     max(32 * _MIB,
                                         2 * flash_vmem_bytes(tq, tk))))),
        cost_estimate=pl.CostEstimate(
            flops=int(flash_flops), transcendentals=int(flash_trans),
            bytes_accessed=int(flash_bytes)),
    )(wq_a, wk_a, wv_a)

    # Strip sequence and lane padding outside the kernel.
    return out_padded[:, :L, :d_v]


def init_params(key, d_inp, d_q, d_k, d_v):
    """Deterministic init matching the module's __init__ shapes.
    Wq/Wk/Wv: xavier-normal [d_inp, d_*]; biases: uniform(0,1) [d_*]."""
    ks = jax.random.split(key, 6)

    def xavier_normal(k, i_dim, o_dim):
        std = math.sqrt(2.0 / (i_dim + o_dim))
        return jax.random.normal(k, (i_dim, o_dim), dtype=jnp.float32) * std

    return {
        "Wq": xavier_normal(ks[0], d_inp, d_q),
        "bq": jax.random.uniform(ks[1], (d_q,), dtype=jnp.float32),
        "Wk": xavier_normal(ks[2], d_inp, d_k),
        "bk": jax.random.uniform(ks[3], (d_k,), dtype=jnp.float32),
        "Wv": xavier_normal(ks[4], d_inp, d_v),
        "bv": jax.random.uniform(ks[5], (d_v,), dtype=jnp.float32),
    }


def attention_ref(query, key, value, params):
    """Pure-JAX f32 reference (mirrors the PyTorch forward) for validation."""
    def affine(x, W, b):
        return jax.nn.relu(jnp.matmul(x, W) + b)

    wq = affine(query, params["Wq"], params["bq"])
    wk = affine(key, params["Wk"], params["bk"])
    wv = affine(value, params["Wv"], params["bv"])
    scores = jnp.einsum("bld,bmd->blm", wq, wk) / jnp.sqrt(
        jnp.float32(key.shape[-1]))
    p = jax.nn.softmax(scores, axis=2)
    return jnp.einsum("blm,bmd->bld", p, wv)


if __name__ == "__main__":
    B, L = 2, 8
    d_inp, d_q, d_k, d_v = 32, 16, 16, 16

    root = jax.random.PRNGKey(0)
    k_p, k_q, k_k, k_v = jax.random.split(root, 4)

    params = init_params(k_p, d_inp, d_q, d_k, d_v)
    query = jax.random.normal(k_q, (B, L, d_inp), dtype=jnp.float32)
    key = jax.random.normal(k_k, (B, L, d_inp), dtype=jnp.float32)
    value = jax.random.normal(k_v, (B, L, d_inp), dtype=jnp.float32)

    out = attention_pallas(query, key, value, params)
    out = jax.block_until_ready(out)

    ref = attention_ref(query, key, value, params)
    assert out.shape == (B, L, d_v)
    # bf16 MXU operands for all matmuls + approx reciprocal -> looser tolerance
    # than a pure-f32 comparison.
    assert jnp.allclose(out, ref, atol=5e-2, rtol=5e-2), "mismatch vs reference"

    print("KERNEL_OK")
</pallas_src>

<mosaic_0001>
module attributes {stable_mosaic.version = 11 : i64} {
  func.func @_project_kernel(%arg0: i32, %arg1: i32, %arg2: memref<1x16x32xbf16, #tpu.memory_space<vmem>>, %arg3: memref<1x16x32xbf16, #tpu.memory_space<vmem>>, %arg4: memref<1x16x32xbf16, #tpu.memory_space<vmem>>, %arg5: memref<32x128xbf16, #tpu.memory_space<vmem>>, %arg6: memref<1x128xf32, #tpu.memory_space<vmem>>, %arg7: memref<32x128xbf16, #tpu.memory_space<vmem>>, %arg8: memref<1x128xf32, #tpu.memory_space<vmem>>, %arg9: memref<32x128xbf16, #tpu.memory_space<vmem>>, %arg10: memref<1x128xf32, #tpu.memory_space<vmem>>, %arg11: memref<1x16x128xbf16, #tpu.memory_space<vmem>>, %arg12: memref<1x16x128xbf16, #tpu.memory_space<vmem>>, %arg13: memref<1x16x128xbf16, #tpu.memory_space<vmem>>) attributes {dimension_semantics = [#tpu.dimension_semantics<parallel>, #tpu.dimension_semantics<parallel>], iteration_bounds = array<i64: 2, 1>, scalar_prefetch = 0 : i64, scratch_operands = 0 : i64, tpu.core_type = #tpu.core_type<tc>, window_params = [{transform_indices = @transform_0, window_bounds = array<i64: 1, 16, 32>}, {transform_indices = @transform_1, window_bounds = array<i64: 1, 16, 32>}, {transform_indices = @transform_2, window_bounds = array<i64: 1, 16, 32>}, {pipeline_mode = #tpu.pipeline_mode<synchronous>, transform_indices = @transform_3, window_bounds = array<i64: 32, 128>}, {pipeline_mode = #tpu.pipeline_mode<synchronous>, transform_indices = @transform_4, window_bounds = array<i64: 1, 128>}, {pipeline_mode = #tpu.pipeline_mode<synchronous>, transform_indices = @transform_5, window_bounds = array<i64: 32, 128>}, {pipeline_mode = #tpu.pipeline_mode<synchronous>, transform_indices = @transform_6, window_bounds = array<i64: 1, 128>}, {pipeline_mode = #tpu.pipeline_mode<synchronous>, transform_indices = @transform_7, window_bounds = array<i64: 32, 128>}, {pipeline_mode = #tpu.pipeline_mode<synchronous>, transform_indices = @transform_8, window_bounds = array<i64: 1, 128>}, {transform_indices = @transform_9, window_bounds = array<i64: 1, 16, 128>}, {transform_indices = @transform_10, window_bounds = array<i64: 1, 16, 128>}, {transform_indices = @transform_11, window_bounds = array<i64: 1, 16, 128>}]} {
    %c0 = arith.constant 0 : index
    %c0_0 = arith.constant 0 : index
    %c0_1 = arith.constant 0 : index
    %0 = vector.load %arg2[%c0, %c0_0, %c0_1] : memref<1x16x32xbf16, #tpu.memory_space<vmem>>, vector<1x16x32xbf16>
    %1 = vector.shape_cast %0 : vector<1x16x32xbf16> to vector<16x32xbf16>
    %c0_2 = arith.constant 0 : index
    %c0_3 = arith.constant 0 : index
    %2 = vector.load %arg5[%c0_2, %c0_3] : memref<32x128xbf16, #tpu.memory_space<vmem>>, vector<32x128xbf16>
    %cst = arith.constant dense<0.000000e+00> : vector<16x128xf32>
    %3 = tpu.matmul %1, %2, %cst {dimension_numbers = #tpu.dot_dimension_numbers<[1], [0], [0], [1], [0, 0, 1, 1], [], []>} : vector<16x32xbf16>, vector<32x128xbf16>, vector<16x128xf32> -> vector<16x128xf32>
    %c0_4 = arith.constant 0 : index
    %c0_5 = arith.constant 0 : index
    %4 = vector.load %arg6[%c0_4, %c0_5] : memref<1x128xf32, #tpu.memory_space<vmem>>, vector<1x128xf32>
    %5 = vector.broadcast %4 : vector<1x128xf32> to vector<16x128xf32>
    %6 = arith.addf %3, %5 : vector<16x128xf32>
    %cst_6 = arith.constant 0.000000e+00 : f32
    %7 = vector.broadcast %cst_6 : f32 to vector<16x128xf32>
    %8 = arith.maximumf %6, %7 : vector<16x128xf32>
    %9 = arith.truncf %8 : vector<16x128xf32> to vector<16x128xbf16>
    %c0_7 = arith.constant 0 : index
    %c0_8 = arith.constant 0 : index
    %c0_9 = arith.constant 0 : index
    %10 = vector.load %arg11[%c0_7, %c0_8, %c0_9] : memref<1x16x128xbf16, #tpu.memory_space<vmem>>, vector<1x16x128xbf16>
    %11 = vector.shape_cast %10 : vector<1x16x128xbf16> to vector<16x128xbf16>
    %12 = vector.shape_cast %9 : vector<16x128xbf16> to vector<1x16x128xbf16>
    tpu.vector_store %arg11[%c0_7, %c0_8, %c0_9], %12 {strides = array<i32>} : memref<1x16x128xbf16, #tpu.memory_space<vmem>>, vector<1x16x128xbf16>,
    %c0_10 = arith.constant 0 : index
    %c0_11 = arith.constant 0 : index
    %c0_12 = arith.constant 0 : index
    %13 = vector.load %arg3[%c0_10, %c0_11, %c0_12] : memref<1x16x32xbf16, #tpu.memory_space<vmem>>, vector<1x16x32xbf16>
    %14 = vector.shape_cast %13 : vector<1x16x32xbf16> to vector<16x32xbf16>
    %c0_13 = arith.constant 0 : index
    %c0_14 = arith.constant 0 : index
    %15 = vector.load %arg7[%c0_13, %c0_14] : memref<32x128xbf16, #tpu.memory_space<vmem>>, vector<32x128xbf16>
    %cst_15 = arith.constant dense<0.000000e+00> : vector<16x128xf32>
    %16 = tpu.matmul %14, %15, %cst_15 {dimension_numbers = #tpu.dot_dimension_numbers<[1], [0], [0], [1], [0, 0, 1, 1], [], []>} : vector<16x32xbf16>, vector<32x128xbf16>, vector<16x128xf32> -> vector<16x128xf32>
    %c0_16 = arith.constant 0 : index
    %c0_17 = arith.constant 0 : index
    %17 = vector.load %arg8[%c0_16, %c0_17] : memref<1x128xf32, #tpu.memory_space<vmem>>, vector<1x128xf32>
    %18 = vector.broadcast %17 : vector<1x128xf32> to vector<16x128xf32>
    %19 = arith.addf %16, %18 : vector<16x128xf32>
    %cst_18 = arith.constant 0.000000e+00 : f32
    %20 = vector.broadcast %cst_18 : f32 to vector<16x128xf32>
    %21 = arith.maximumf %19, %20 : vector<16x128xf32>
    %22 = arith.truncf %21 : vector<16x128xf32> to vector<16x128xbf16>
    %c0_19 = arith.constant 0 : index
    %c0_20 = arith.constant 0 : index
    %c0_21 = arith.constant 0 : index
    %23 = vector.load %arg12[%c0_19, %c0_20, %c0_21] : memref<1x16x128xbf16, #tpu.memory_space<vmem>>, vector<1x16x128xbf16>
    %24 = vector.shape_cast %23 : vector<1x16x128xbf16> to vector<16x128xbf16>
    %25 = vector.shape_cast %22 : vector<16x128xbf16> to vector<1x16x128xbf16>
    tpu.vector_store %arg12[%c0_19, %c0_20, %c0_21], %25 {strides = array<i32>} : memref<1x16x128xbf16, #tpu.memory_space<vmem>>, vector<1x16x128xbf16>,
    %c0_22 = arith.constant 0 : index
    %c0_23 = arith.constant 0 : index
    %c0_24 = arith.constant 0 : index
    %26 = vector.load %arg4[%c0_22, %c0_23, %c0_24] : memref<1x16x32xbf16, #tpu.memory_space<vmem>>, vector<1x16x32xbf16>
    %27 = vector.shape_cast %26 : vector<1x16x32xbf16> to vector<16x32xbf16>
    %c0_25 = arith.constant 0 : index
    %c0_26 = arith.constant 0 : index
    %28 = vector.load %arg9[%c0_25, %c0_26] : memref<32x128xbf16, #tpu.memory_space<vmem>>, vector<32x128xbf16>
    %cst_27 = arith.constant dense<0.000000e+00> : vector<16x128xf32>
    %29 = tpu.matmul %27, %28, %cst_27 {dimension_numbers = #tpu.dot_dimension_numbers<[1], [0], [0], [1], [0, 0, 1, 1], [], []>} : vector<16x32xbf16>, vector<32x128xbf16>, vector<16x128xf32> -> vector<16x128xf32>
    %c0_28 = arith.constant 0 : index
    %c0_29 = arith.constant 0 : index
    %30 = vector.load %arg10[%c0_28, %c0_29] : memref<1x128xf32, #tpu.memory_space<vmem>>, vector<1x128xf32>
    %31 = vector.broadcast %30 : vector<1x128xf32> to vector<16x128xf32>
    %32 = arith.addf %29, %31 : vector<16x128xf32>
    %cst_30 = arith.constant 0.000000e+00 : f32
    %33 = vector.broadcast %cst_30 : f32 to vector<16x128xf32>
    %34 = arith.maximumf %32, %33 : vector<16x128xf32>
    %35 = arith.truncf %34 : vector<16x128xf32> to vector<16x128xbf16>
    %c0_31 = arith.constant 0 : index
    %c0_32 = arith.constant 0 : index
    %c0_33 = arith.constant 0 : index
    %36 = vector.load %arg13[%c0_31, %c0_32, %c0_33] : memref<1x16x128xbf16, #tpu.memory_space<vmem>>, vector<1x16x128xbf16>
    %37 = vector.shape_cast %36 : vector<1x16x128xbf16> to vector<16x128xbf16>
    %38 = vector.shape_cast %35 : vector<16x128xbf16> to vector<1x16x128xbf16>
    tpu.vector_store %arg13[%c0_31, %c0_32, %c0_33], %38 {strides = array<i32>} : memref<1x16x128xbf16, #tpu.memory_space<vmem>>, vector<1x16x128xbf16>,
    return
  }
  func.func @transform_0(%arg0: i32, %arg1: i32) -> (i32, i32, i32) {
    %c0_i32 = arith.constant 0 : i32
    %c0_i32_0 = arith.constant 0 : i32
    return %arg0, %arg1, %c0_i32 : i32, i32, i32
  }
  func.func @transform_1(%arg0: i32, %arg1: i32) -> (i32, i32, i32) {
    %c0_i32 = arith.constant 0 : i32
    %c0_i32_0 = arith.constant 0 : i32
    return %arg0, %arg1, %c0_i32 : i32, i32, i32
  }
  func.func @transform_2(%arg0: i32, %arg1: i32) -> (i32, i32, i32) {
    %c0_i32 = arith.constant 0 : i32
    %c0_i32_0 = arith.constant 0 : i32
    return %arg0, %arg1, %c0_i32 : i32, i32, i32
  }
  func.func @transform_3(%arg0: i32, %arg1: i32) -> (i32, i32) {
    %c0_i32 = arith.constant 0 : i32
    %c0_i32_0 = arith.constant 0 : i32
    %c0_i32_1 = arith.constant 0 : i32
    return %c0_i32, %c0_i32_0 : i32, i32
  }
  func.func @transform_4(%arg0: i32, %arg1: i32) -> (i32, i32) {
    %c0_i32 = arith.constant 0 : i32
    %c0_i32_0 = arith.constant 0 : i32
    %c0_i32_1 = arith.constant 0 : i32
    return %c0_i32, %c0_i32_0 : i32, i32
  }
  func.func @transform_5(%arg0: i32, %arg1: i32) -> (i32, i32) {
    %c0_i32 = arith.constant 0 : i32
    %c0_i32_0 = arith.constant 0 : i32
    %c0_i32_1 = arith.constant 0 : i32
    return %c0_i32, %c0_i32_0 : i32, i32
  }
  func.func @transform_6(%arg0: i32, %arg1: i32) -> (i32, i32) {
    %c0_i32 = arith.constant 0 : i32
    %c0_i32_0 = arith.constant 0 : i32
    %c0_i32_1 = arith.constant 0 : i32
    return %c0_i32, %c0_i32_0 : i32, i32
  }
  func.func @transform_7(%arg0: i32, %arg1: i32) -> (i32, i32) {
    %c0_i32 = arith.constant 0 : i32
    %c0_i32_0 = arith.constant 0 : i32
    %c0_i32_1 = arith.constant 0 : i32
    return %c0_i32, %c0_i32_0 : i32, i32
  }
  func.func @transform_8(%arg0: i32, %arg1: i32) -> (i32, i32) {
    %c0_i32 = arith.constant 0 : i32
    %c0_i32_0 = arith.constant 0 : i32
    %c0_i32_1 = arith.constant 0 : i32
    return %c0_i32, %c0_i32_0 : i32, i32
  }
  func.func @transform_9(%arg0: i32, %arg1: i32) -> (i32, i32, i32) {
    %c0_i32 = arith.constant 0 : i32
    %c0_i32_0 = arith.constant 0 : i32
    return %arg0, %arg1, %c0_i32 : i32, i32, i32
  }
  func.func @transform_10(%arg0: i32, %arg1: i32) -> (i32, i32, i32) {
    %c0_i32 = arith.constant 0 : i32
    %c0_i32_0 = arith.constant 0 : i32
    return %arg0, %arg1, %c0_i32 : i32, i32, i32
  }
  func.func @transform_11(%arg0: i32, %arg1: i32) -> (i32, i32, i32) {
    %c0_i32 = arith.constant 0 : i32
    %c0_i32_0 = arith.constant 0 : i32
    return %arg0, %arg1, %c0_i32 : i32, i32, i32
  }
}

</mosaic_0001>

<llo_original>
// kernel: tpu_custom_call.1
$region0: #{tpu_custom_call.1}
  #allocation0 [shape = 'u32[]', space=smem, size = 0x4, offset = 0x4, fixed_abs, tag = 'smem constant byte address 0x4 - core index']
  #allocation1 [shape = 'u32[144,128]{1,0:T(1,128)}', space=vmem, size = 0x12000, scoped, tag = 'internal scratch']
  %s0 = inlined_call_operand.hbm [shape: bf16[2,16,32], index: 0, kind: input, shape index: {}]
  %s1 = inlined_call_operand.hbm [shape: bf16[2,16,32], index: 1, kind: input, shape index: {}]
  %s2 = inlined_call_operand.hbm [shape: bf16[2,16,32], index: 2, kind: input, shape index: {}]
  %s3 = inlined_call_operand.hbm [shape: bf16[32,128], index: 3, kind: input, shape index: {}]
  %s4 = inlined_call_operand.vmem [shape: f32[1,128], index: 4, kind: input, shape index: {}]
  %s5 = inlined_call_operand.vmem [shape: bf16[32,128], index: 5, kind: input, shape index: {}]
  %s6 = inlined_call_operand.vmem [shape: f32[1,128], index: 6, kind: input, shape index: {}]
  %s7 = inlined_call_operand.hbm [shape: bf16[32,128], index: 7, kind: input, shape index: {}]
  %s8 = inlined_call_operand.vmem [shape: f32[1,128], index: 8, kind: input, shape index: {}]
  %s9 = inlined_call_operand.hbm [shape: bf16[2,16,128], index: 9, kind: output, shape index: {0}]
  %s10 = inlined_call_operand.hbm [shape: bf16[2,16,128], index: 10, kind: output, shape index: {1}]
  %s11 = inlined_call_operand.hbm [shape: bf16[2,16,128], index: 11, kind: output, shape index: {2}]
  %12 = xla_tuple %s9, %s10, %s11
  %s13 = sld [smem:[#allocation0]]
  $region105: #{tpu_custom_call.1} parent=0
    _
  %s15 = ssub.s32 1, %s13
  %s16 = scalar_select 0, %s15, %s13
  $region1: #{tpu_custom_call.1} parent=0
    #allocation2 [shape = 'u8[8192]{0}', space=vmem, size = 0x2000, scoped, tag = 'input window, operand 0']
    #allocation3 [shape = 's32[2]{0}', space=sflag, size = 0x8, scoped, tag = 'scoped memory for tpu_custom_call.1']
    #allocation4 [shape = 's32[2]{0}', space=sflag, size = 0x8, scoped, tag = 'scoped memory for tpu_custom_call.1']
    #allocation5 [shape = 'u8[8192]{0}', space=vmem, size = 0x2000, scoped, tag = 'input window, operand 1']
    #allocation6 [shape = 's32[2]{0}', space=sflag, size = 0x8, scoped, tag = 'scoped memory for tpu_custom_call.1']
    #allocation7 [shape = 'u8[8192]{0}', space=vmem, size = 0x2000, scoped, tag = 'input window, operand 2']
    #allocation8 [shape = 'u8[8192]{0}', space=vmem, size = 0x2000, scoped, tag = 'input window, operand 3, single buffered']
    #allocation9 [shape = 's32[1]{0}', space=sflag, size = 0x4, scoped, tag = 'scoped memory for tpu_custom_call.1']
    #allocation10 [shape = 'u8[8192]{0}', space=vmem, size = 0x2000, scoped, tag = 'input window, operand 7, single buffered']
    #allocation11 [shape = 'u8[8192]{0}', space=vmem, size = 0x2000, scoped, tag = 'output window, operand 0']
    #allocation12 [shape = 'u8[8192]{0}', space=vmem, size = 0x2000, scoped, tag = 'output window, operand 1']
    #allocation13 [shape = 's32[2]{0}', space=sflag, size = 0x8, scoped, tag = 'scoped memory for tpu_custom_call.1']
    #allocation14 [shape = 'u8[8192]{0}', space=vmem, size = 0x2000, scoped, tag = 'output window, operand 2']
    %17 = vsyncpa [#allocation3], 0
    %s18 = scalar_lea.sflag [#allocation3], 1
    %19 = vsyncpa %s18, 0
    %20 = vsyncpa [#allocation6], 0
    %s21 = scalar_lea.sflag [#allocation6], 1
    %22 = vsyncpa %s21, 0
    %23 = vsyncpa [#allocation9], 0
    %24 = vsyncpa [#allocation4], 0
    %s25 = scalar_lea.sflag [#allocation4], 1
    %26 = vsyncpa %s25, 0
    %27 = vsyncpa [#allocation13], 0
    %s28 = scalar_lea.sflag [#allocation13], 1
    %29 = vsyncpa %s28, 0
    loop: start=0, step=1, limit=4
    $region2: #{tpu_custom_call.1} parent=1 // loop_pre_header
      _
    $region3: #{tpu_custom_call.1} parent=1 // loop_header
      %s31 = sphi 0, %s35
      %p32 = scmp.ge.s32.totalorder %s31, 4
      %s38 = sphi 0, %s50
      %s39 = sphi 0, %s46
      %s40 = sphi 0, %s38
      %s41 = sphi 0, %s39
      %s42 = sphi 0, %s40
      %s43 = sphi 0, %s41
      %s55 = sphi 0, %s57
      %s58 = sphi 0, %s55
      %s59 = sphi 0, %s58
      %s75 = sphi 0, %s59
      %s83 = sphi 0, %s85
      %s86 = sphi 0, %s83
      %s87 = sphi 0, %s86
      %s103 = sphi 0, %s87
      %s111 = sphi 0, %s113
      %s114 = sphi 0, %s111
      %s115 = sphi 0, %s114
      %s131 = sphi 0, %s115
      %s135 = sphi 0, %s135
      %s137 = sphi 0, %s135
      %s138 = sphi 0, %s137
      %s152 = sphi 0, %s138
      %s156 = sphi 0, %s156
      %s158 = sphi 0, %s156
      %s159 = sphi 0, %s158
      %s173 = sphi 0, %s159
      %s177 = sphi 0, %s177
      %s179 = sphi 0, %s177
      %s180 = sphi 0, %s179
      %s194 = sphi 0, %s180
      %s198 = sphi 0, %s198
      %s200 = sphi 0, %s198
      %s201 = sphi 0, %s200
      %s215 = sphi 0, %s201
      %s219 = sphi 0, %s219
      %s221 = sphi 0, %s219
      %s222 = sphi 0, %s221
      %s236 = sphi 0, %s222
      %s240 = sphi 0, %s240
      %s242 = sphi 0, %s240
      %s243 = sphi 0, %s242
      %s257 = sphi 0, %s243
      %s265 = sphi 0, %s267
      %s268 = sphi 0, %s265
      %s269 = sphi 0, %s268
      %s285 = sphi 0, %s269
      %s293 = sphi 0, %s295
      %s296 = sphi 0, %s293
      %s297 = sphi 0, %s296
      %s313 = sphi 0, %s297
      %s321 = sphi 0, %s323
      %s324 = sphi 0, %s321
      %s325 = sphi 0, %s324
      %s341 = sphi 0, %s325
    $region4: #{tpu_custom_call.1} parent=1 // loop_header_branch
      %34 = sbr.rel (%p32) target = $region8
    $region5: #{tpu_custom_call.1} parent=1 // loop_body
      %s36 = ssub.s32 %s31, 1
      %s37 = ssub.s32 %s31, 2
      %s44 = sadd.s32 1, %s39
      %p45 = scmp.ge.s32.totalorder %s44, 1
      %s46 = scalar_select %p45, 0, %s44
      %s47 = sadd.s32 1, %s38
      %s48 = scalar_select %p45, %s47, %s38
      %p49 = scmp.ge.s32.totalorder %s48, 2
      %s50 = scalar_select %p49, 0, %s48
      %s51 = ssub.s32 %s38, %s50
      %s52 = ssub.s32 %s39, %s46
      %s53 = sor.u32 %s51, %s52
      %p54 = scmp.eq.s32.totalorder %s53, 0
      %s56 = sadd.s32 %s55, 1
      %s57 = scalar_select %p54, %s55, %s56
      %p60 = pneg %p54
      %p61 = scmp.eq.s32.totalorder %s31, 1
      %p62 = por %p60, %p61
      %p63 = scmp.ne.s32.totalorder %s55, %s58
      %p64 = scmp.eq.s32.totalorder %s31, 0
      %p65 = por %p63, %p64
      %p66 = scmp.ne.s32.totalorder %s55, %s58
      %p67 = scmp.eq.s32.totalorder %s36, 1
      %p68 = por %p66, %p67
      %p69 = scmp.ne.s32.totalorder %s58, %s59
      %p70 = scmp.eq.s32.totalorder %s36, 0
      %p71 = por %p69, %p70
      %p72 = scmp.ne.s32.totalorder %s58, %s59
      %p73 = scmp.eq.s32.totalorder %s37, 1
      %p74 = por %p72, %p73
      %p76 = scmp.ne.s32.totalorder %s59, %s75
      %p77 = scmp.eq.s32.totalorder %s37, 0
      %p78 = por %p76, %p77
      %s79 = ssub.s32 %s38, %s50
      %s80 = ssub.s32 %s39, %s46
      %s81 = sor.u32 %s79, %s80
      %p82 = scmp.eq.s32.totalorder %s81, 0
      %s84 = sadd.s32 %s83, 1
      %s85 = scalar_select %p82, %s83, %s84
      %p88 = pneg %p82
      %p89 = scmp.eq.s32.totalorder %s31, 1
      %p90 = por %p88, %p89
      %p91 = scmp.ne.s32.totalorder %s83, %s86
      %p92 = scmp.eq.s32.totalorder %s31, 0
      %p93 = por %p91, %p92
      %p94 = scmp.ne.s32.totalorder %s83, %s86
      %p95 = scmp.eq.s32.totalorder %s36, 1
      %p96 = por %p94, %p95
      %p97 = scmp.ne.s32.totalorder %s86, %s87
      %p98 = scmp.eq.s32.totalorder %s36, 0
      %p99 = por %p97, %p98
      %p100 = scmp.ne.s32.totalorder %s86, %s87
      %p101 = scmp.eq.s32.totalorder %s37, 1
      %p102 = por %p100, %p101
      %p104 = scmp.ne.s32.totalorder %s87, %s103
      %p105 = scmp.eq.s32.totalorder %s37, 0
      %p106 = por %p104, %p105
      %s107 = ssub.s32 %s38, %s50
      %s108 = ssub.s32 %s39, %s46
      %s109 = sor.u32 %s107, %s108
      %p110 = scmp.eq.s32.totalorder %s109, 0
      %s112 = sadd.s32 %s111, 1
      %s113 = scalar_select %p110, %s111, %s112
      %p116 = pneg %p110
      %p117 = scmp.eq.s32.totalorder %s31, 1
      %p118 = por %p116, %p117
      %p119 = scmp.ne.s32.totalorder %s111, %s114
      %p120 = scmp.eq.s32.totalorder %s31, 0
      %p121 = por %p119, %p120
      %p122 = scmp.ne.s32.totalorder %s111, %s114
      %p123 = scmp.eq.s32.totalorder %s36, 1
      %p124 = por %p122, %p123
      %p125 = scmp.ne.s32.totalorder %s114, %s115
      %p126 = scmp.eq.s32.totalorder %s36, 0
      %p127 = por %p125, %p126
      %p128 = scmp.ne.s32.totalorder %s114, %s115
      %p129 = scmp.eq.s32.totalorder %s37, 1
      %p130 = por %p128, %p129
      %p132 = scmp.ne.s32.totalorder %s115, %s131
      %p133 = scmp.eq.s32.totalorder %s37, 0
      %p134 = por %p132, %p133
      %s136 = sadd.s32 %s135, 1
      %p139 = scmp.eq.s32.totalorder %s31, 1
      %p140 = scmp.ne.s32.totalorder %s135, %s137
      %p141 = scmp.eq.s32.totalorder %s31, 0
      %p142 = por %p140, %p141
      %p143 = scmp.ne.s32.totalorder %s135, %s137
      %p144 = scmp.eq.s32.totalorder %s36, 1
      %p145 = por %p143, %p144
      %p146 = scmp.ne.s32.totalorder %s137, %s138
      %p147 = scmp.eq.s32.totalorder %s36, 0
      %p148 = por %p146, %p147
      %p149 = scmp.ne.s32.totalorder %s137, %s138
      %p150 = scmp.eq.s32.totalorder %s37, 1
      %p151 = por %p149, %p150
      %p153 = scmp.ne.s32.totalorder %s138, %s152
      %p154 = scmp.eq.s32.totalorder %s37, 0
      %p155 = por %p153, %p154
      %s157 = sadd.s32 %s156, 1
      %p160 = scmp.eq.s32.totalorder %s31, 1
      %p161 = scmp.ne.s32.totalorder %s156, %s158
      %p162 = scmp.eq.s32.totalorder %s31, 0
      %p163 = por %p161, %p162
      %p164 = scmp.ne.s32.totalorder %s156, %s158
      %p165 = scmp.eq.s32.totalorder %s36, 1
      %p166 = por %p164, %p165
      %p167 = scmp.ne.s32.totalorder %s158, %s159
      %p168 = scmp.eq.s32.totalorder %s36, 0
      %p169 = por %p167, %p168
      %p170 = scmp.ne.s32.totalorder %s158, %s159
      %p171 = scmp.eq.s32.totalorder %s37, 1
      %p172 = por %p170, %p171
      %p174 = scmp.ne.s32.totalorder %s159, %s173
      %p175 = scmp.eq.s32.totalorder %s37, 0
      %p176 = por %p174, %p175
      %s178 = sadd.s32 %s177, 1
      %p181 = scmp.eq.s32.totalorder %s31, 1
      %p182 = scmp.ne.s32.totalorder %s177, %s179
      %p183 = scmp.eq.s32.totalorder %s31, 0
      %p184 = por %p182, %p183
      %p185 = scmp.ne.s32.totalorder %s177, %s179
      %p186 = scmp.eq.s32.totalorder %s36, 1
      %p187 = por %p185, %p186
      %p188 = scmp.ne.s32.totalorder %s179, %s180
      %p189 = scmp.eq.s32.totalorder %s36, 0
      %p190 = por %p188, %p189
      %p191 = scmp.ne.s32.totalorder %s179, %s180
      %p192 = scmp.eq.s32.totalorder %s37, 1
      %p193 = por %p191, %p192
      %p195 = scmp.ne.s32.totalorder %s180, %s194
      %p196 = scmp.eq.s32.totalorder %s37, 0
      %p197 = por %p195, %p196
      %s199 = sadd.s32 %s198, 1
      %p202 = scmp.eq.s32.totalorder %s31, 1
      %p203 = scmp.ne.s32.totalorder %s198, %s200
      %p204 = scmp.eq.s32.totalorder %s31, 0
      %p205 = por %p203, %p204
      %p206 = scmp.ne.s32.totalorder %s198, %s200
      %p207 = scmp.eq.s32.totalorder %s36, 1
      %p208 = por %p206, %p207
      %p209 = scmp.ne.s32.totalorder %s200, %s201
      %p210 = scmp.eq.s32.totalorder %s36, 0
      %p211 = por %p209, %p210
      %p212 = scmp.ne.s32.totalorder %s200, %s201
      %p213 = scmp.eq.s32.totalorder %s37, 1
      %p214 = por %p212, %p213
      %p216 = scmp.ne.s32.totalorder %s201, %s215
      %p217 = scmp.eq.s32.totalorder %s37, 0
      %p218 = por %p216, %p217
      %s220 = sadd.s32 %s219, 1
      %p223 = scmp.eq.s32.totalorder %s31, 1
      %p224 = scmp.ne.s32.totalorder %s219, %s221
      %p225 = scmp.eq.s32.totalorder %s31, 0
      %p226 = por %p224, %p225
      %p227 = scmp.ne.s32.totalorder %s219, %s221
      %p228 = scmp.eq.s32.totalorder %s36, 1
      %p229 = por %p227, %p228
      %p230 = scmp.ne.s32.totalorder %s221, %s222
      %p231 = scmp.eq.s32.totalorder %s36, 0
      %p232 = por %p230, %p231
      %p233 = scmp.ne.s32.totalorder %s221, %s222
      %p234 = scmp.eq.s32.totalorder %s37, 1
      %p235 = por %p233, %p234
      %p237 = scmp.ne.s32.totalorder %s222, %s236
      %p238 = scmp.eq.s32.totalorder %s37, 0
      %p239 = por %p237, %p238
      %s241 = sadd.s32 %s240, 1
      %p244 = scmp.eq.s32.totalorder %s31, 1
      %p245 = scmp.ne.s32.totalorder %s240, %s242
      %p246 = scmp.eq.s32.totalorder %s31, 0
      %p247 = por %p245, %p246
      %p248 = scmp.ne.s32.totalorder %s240, %s242
      %p249 = scmp.eq.s32.totalorder %s36, 1
      %p250 = por %p248, %p249
      %p251 = scmp.ne.s32.totalorder %s242, %s243
      %p252 = scmp.eq.s32.totalorder %s36, 0
      %p253 = por %p251, %p252
      %p254 = scmp.ne.s32.totalorder %s242, %s243
      %p255 = scmp.eq.s32.totalorder %s37, 1
      %p256 = por %p254, %p255
      %p258 = scmp.ne.s32.totalorder %s243, %s257
      %p259 = scmp.eq.s32.totalorder %s37, 0
      %p260 = por %p258, %p259
      %s261 = ssub.s32 %s38, %s50
      %s262 = ssub.s32 %s39, %s46
      %s263 = sor.u32 %s261, %s262
      %p264 = scmp.eq.s32.totalorder %s263, 0
      %s266 = sadd.s32 %s265, 1
      %s267 = scalar_select %p264, %s265, %s266
      %p270 = pneg %p264
      %p271 = scmp.eq.s32.totalorder %s31, 1
      %p272 = por %p270, %p271
      %p273 = scmp.ne.s32.totalorder %s265, %s268
      %p274 = scmp.eq.s32.totalorder %s31, 0
      %p275 = por %p273, %p274
      %p276 = scmp.ne.s32.totalorder %s265, %s268
      %p277 = scmp.eq.s32.totalorder %s36, 1
      %p278 = por %p276, %p277
      %p279 = scmp.ne.s32.totalorder %s268, %s269
      %p280 = scmp.eq.s32.totalorder %s36, 0
      %p281 = por %p279, %p280
      %p282 = scmp.ne.s32.totalorder %s268, %s269
      %p283 = scmp.eq.s32.totalorder %s37, 1
      %p284 = por %p282, %p283
      %p286 = scmp.ne.s32.totalorder %s269, %s285
      %p287 = scmp.eq.s32.totalorder %s37, 0
      %p288 = por %p286, %p287
      %s289 = ssub.s32 %s38, %s50
      %s290 = ssub.s32 %s39, %s46
      %s291 = sor.u32 %s289, %s290
      %p292 = scmp.eq.s32.totalorder %s291, 0
      %s294 = sadd.s32 %s293, 1
      %s295 = scalar_select %p292, %s293, %s294
      %p298 = pneg %p292
      %p299 = scmp.eq.s32.totalorder %s31, 1
      %p300 = por %p298, %p299
      %p301 = scmp.ne.s32.totalorder %s293, %s296
      %p302 = scmp.eq.s32.totalorder %s31, 0
      %p303 = por %p301, %p302
      %p304 = scmp.ne.s32.totalorder %s293, %s296
      %p305 = scmp.eq.s32.totalorder %s36, 1
      %p306 = por %p304, %p305
      %p307 = scmp.ne.s32.totalorder %s296, %s297
      %p308 = scmp.eq.s32.totalorder %s36, 0
      %p309 = por %p307, %p308
      %p310 = scmp.ne.s32.totalorder %s296, %s297
      %p311 = scmp.eq.s32.totalorder %s37, 1
      %p312 = por %p310, %p311
      %p314 = scmp.ne.s32.totalorder %s297, %s313
      %p315 = scmp.eq.s32.totalorder %s37, 0
      %p316 = por %p314, %p315
      %s317 = ssub.s32 %s38, %s50
      %s318 = ssub.s32 %s39, %s46
      %s319 = sor.u32 %s317, %s318
      %p320 = scmp.eq.s32.totalorder %s319, 0
      %s322 = sadd.s32 %s321, 1
      %s323 = scalar_select %p320, %s321, %s322
      %p326 = pneg %p320
      %p327 = scmp.eq.s32.totalorder %s31, 1
      %p328 = por %p326, %p327
      %p329 = scmp.ne.s32.totalorder %s321, %s324
      %p330 = scmp.eq.s32.totalorder %s31, 0
      %p331 = por %p329, %p330
      %p332 = scmp.ne.s32.totalorder %s321, %s324
      %p333 = scmp.eq.s32.totalorder %s36, 1
      %p334 = por %p332, %p333
      %p335 = scmp.ne.s32.totalorder %s324, %s325
      %p336 = scmp.eq.s32.totalorder %s36, 0
      %p337 = por %p335, %p336
      %p338 = scmp.ne.s32.totalorder %s324, %s325
      %p339 = scmp.eq.s32.totalorder %s37, 1
      %p340 = por %p338, %p339
      %p342 = scmp.ne.s32.totalorder %s325, %s341
      %p343 = scmp.eq.s32.totalorder %s37, 0
      %p344 = por %p342, %p343
      %p345 = scmp.le.s32.totalorder 1, %s31
      %p346 = scmp.lt.s32.totalorder %s31, 3
      %p347 = pnand %p345, %p346
      %p348 = pneg %p347
      // Predicated region
      $region9: #{tpu_custom_call.1} parent=5 // pred_check
        _
      $region10: #{tpu_custom_call.1} parent=5 // pred_check_branch
        %350 = sbr.rel (%p347) target = $region12
      $region11: #{tpu_custom_call.1} parent=5 // pred_region
        %s351 = ssub.s32 %s31, 1
        // Predicated region
        $region13: #{tpu_custom_call.1} parent=11 // pred_check
          %p352 = pneg %p148
        $region14: #{tpu_custom_call.1} parent=11 // pred_check_branch
          %354 = sbr.rel (%p352) target = $region16
        $region15: #{tpu_custom_call.1} parent=11 // pred_region
          %s356 = ssub.s32 256, 256
          %357 = vsyncadd [#allocation9], %s356
          %s358 = sshll.u32 [#allocation8], 4
          %s359 = int_to_ptr.vmem [resolvable:$true] %s358
          %364 = dma.hbm_to_vmem [thread:$0]  %s3, 256, %s359, [#allocation9], 64, 64, 4
        $region16: #{tpu_custom_call.1} parent=11 // pred_fallthru
          _
        // Predicated region
        $region17: #{tpu_custom_call.1} parent=11 // pred_check
          %p365 = pneg %p169
        $region18: #{tpu_custom_call.1} parent=11 // pred_check_branch
          %367 = sbr.rel (%p365) target = $region20
        $region19: #{tpu_custom_call.1} parent=11 // pred_region
          _
        $region20: #{tpu_custom_call.1} parent=11 // pred_fallthru
          _
        // Predicated region
        $region21: #{tpu_custom_call.1} parent=11 // pred_check
          %p368 = pneg %p190
        $region22: #{tpu_custom_call.1} parent=11 // pred_check_branch
          %370 = sbr.rel (%p368) target = $region24
        $region23: #{tpu_custom_call.1} parent=11 // pred_region
          _
        $region24: #{tpu_custom_call.1} parent=11 // pred_fallthru
          _
        // Predicated region
        $region25: #{tpu_custom_call.1} parent=11 // pred_check
          %p371 = pneg %p211
        $region26: #{tpu_custom_call.1} parent=11 // pred_check_branch
          %373 = sbr.rel (%p371) target = $region28
        $region27: #{tpu_custom_call.1} parent=11 // pred_region
          _
        $region28: #{tpu_custom_call.1} parent=11 // pred_fallthru
          _
        // Predicated region
        $region29: #{tpu_custom_call.1} parent=11 // pred_check
          %p374 = pneg %p232
        $region30: #{tpu_custom_call.1} parent=11 // pred_check_branch
          %376 = sbr.rel (%p374) target = $region32
        $region31: #{tpu_custom_call.1} parent=11 // pred_region
          %s378 = ssub.s32 256, 256
          %379 = vsyncadd [#allocation9], %s378
          %s380 = sshll.u32 [#allocation10], 4
          %s381 = int_to_ptr.vmem [resolvable:$true] %s380
          %386 = dma.hbm_to_vmem [thread:$0]  %s7, 256, %s381, [#allocation9], 64, 64, 4
        $region32: #{tpu_custom_call.1} parent=11 // pred_fallthru
          _
        // Predicated region
        $region33: #{tpu_custom_call.1} parent=11 // pred_check
          %p387 = pneg %p253
        $region34: #{tpu_custom_call.1} parent=11 // pred_check_branch
          %389 = sbr.rel (%p387) target = $region36
        $region35: #{tpu_custom_call.1} parent=11 // pred_region
          _
        $region36: #{tpu_custom_call.1} parent=11 // pred_fallthru
          _
      $region12: #{tpu_custom_call.1} parent=5 // pred_fallthru
        _
      %p390 = scmp.lt.s32.totalorder %s31, 2
      // Predicated region
      $region37: #{tpu_custom_call.1} parent=5 // pred_check
        %p391 = pneg %p390
      $region38: #{tpu_custom_call.1} parent=5 // pred_check_branch
        %393 = sbr.rel (%p391) target = $region40
      $region39: #{tpu_custom_call.1} parent=5 // pred_region
        // Predicated region
        $region41: #{tpu_custom_call.1} parent=39 // pred_check
          %p394 = pneg %p65
        $region42: #{tpu_custom_call.1} parent=39 // pred_check_branch
          %396 = sbr.rel (%p394) target = $region44
        $region43: #{tpu_custom_call.1} parent=39 // pred_region
          %s397 = sand.u32 %s55, 1
          %s398 = scalar_lea.sflag [#allocation3], %s397
          %s399 = sand.u32 %s55, 1
          %s400 = smul.addr %s399, 8
          %s401 = scalar_lea.vmem [#allocation2], %s400
          %s402 = smul.u32 2, %s39
          %s404 = ssub.s32 128, 128
          %405 = vsyncadd %s398, %s404
          %s406 = smul.addr %s38, 2
          %s407 = sadd.s32 %s402, %s406
          %s408 = smul.addr %s407, 64
          %s409 = scalar_lea.hbm %s0, %s408
          %s410 = sshll.u32 %s401, 4
          %s411 = int_to_ptr.vmem [resolvable:$true] %s410
          %416 = dma.hbm_to_vmem [thread:$0]  %s409, 128, %s411, %s398, 64, 64, 4
        $region44: #{tpu_custom_call.1} parent=39 // pred_fallthru
          _
        // Predicated region
        $region45: #{tpu_custom_call.1} parent=39 // pred_check
          %p417 = pneg %p93
        $region46: #{tpu_custom_call.1} parent=39 // pred_check_branch
          %419 = sbr.rel (%p417) target = $region48
        $region47: #{tpu_custom_call.1} parent=39 // pred_region
          %s420 = sand.u32 %s31, 1
          %s421 = scalar_lea.sflag [#allocation6], %s420
          %s422 = sand.u32 %s83, 1
          %s423 = smul.addr %s422, 8
          %s424 = scalar_lea.vmem [#allocation5], %s423
          %s425 = smul.u32 2, %s39
          %s427 = ssub.s32 128, 128
          %428 = vsyncadd %s421, %s427
          %s429 = smul.addr %s38, 2
          %s430 = sadd.s32 %s425, %s429
          %s431 = smul.addr %s430, 64
          %s432 = scalar_lea.hbm %s1, %s431
          %s433 = sshll.u32 %s424, 4
          %s434 = int_to_ptr.vmem [resolvable:$true] %s433
          %439 = dma.hbm_to_vmem [thread:$0]  %s432, 128, %s434, %s421, 64, 64, 4
        $region48: #{tpu_custom_call.1} parent=39 // pred_fallthru
          _
        // Predicated region
        $region49: #{tpu_custom_call.1} parent=39 // pred_check
          %p440 = pneg %p121
        $region50: #{tpu_custom_call.1} parent=39 // pred_check_branch
          %442 = sbr.rel (%p440) target = $region52
        $region51: #{tpu_custom_call.1} parent=39 // pred_region
          %s443 = sand.u32 %s31, 1
          %s444 = scalar_lea.sflag [#allocation6], %s443
          %s445 = sand.u32 %s111, 1
          %s446 = smul.addr %s445, 8
          %s447 = scalar_lea.vmem [#allocation7], %s446
          %s448 = smul.u32 2, %s39
          %s450 = ssub.s32 128, 128
          %451 = vsyncadd %s444, %s450
          %s452 = smul.addr %s38, 2
          %s453 = sadd.s32 %s448, %s452
          %s454 = smul.addr %s453, 64
          %s455 = scalar_lea.hbm %s2, %s454
          %s456 = sshll.u32 %s447, 4
          %s457 = int_to_ptr.vmem [resolvable:$true] %s456
          %462 = dma.hbm_to_vmem [thread:$0]  %s455, 128, %s457, %s444, 64, 64, 4
        $region52: #{tpu_custom_call.1} parent=39 // pred_fallthru
          _
      $region40: #{tpu_custom_call.1} parent=5 // pred_fallthru
        _
      %p463 = scmp.le.s32.totalorder 1, %s31
      %p464 = scmp.lt.s32.totalorder %s31, 3
      %p465 = pnand %p463, %p464
      %p466 = pneg %p465
      // Predicated region
      $region53: #{tpu_custom_call.1} parent=5 // pred_check
        _
      $region54: #{tpu_custom_call.1} parent=5 // pred_check_branch
        %468 = sbr.rel (%p465) target = $region56
      $region55: #{tpu_custom_call.1} parent=5 // pred_region
        %s469 = ssub.s32 %s31, 1
        %s470 = sand.u32 %s58, 1
        %s471 = scalar_lea.sflag [#allocation3], %s470
        %s472 = sand.u32 %s58, 1
        %s473 = smul.addr %s472, 8
        %s474 = scalar_lea.vmem [#allocation2], %s473
        // Predicated region
        $region57: #{tpu_custom_call.1} parent=55 // pred_check
          %p475 = pneg %p71
        $region58: #{tpu_custom_call.1} parent=55 // pred_check_branch
          %477 = sbr.rel (%p475) target = $region60
        $region59: #{tpu_custom_call.1} parent=55 // pred_region
          %478 = dma.done %s471, 128
        $region60: #{tpu_custom_call.1} parent=55 // pred_fallthru
          _
        %s479 = sand.u32 %s36, 1
        %s480 = scalar_lea.sflag [#allocation6], %s479
        %s481 = sand.u32 %s86, 1
        %s482 = smul.addr %s481, 8
        %s483 = scalar_lea.vmem [#allocation5], %s482
        // Predicated region
        $region61: #{tpu_custom_call.1} parent=55 // pred_check
          %p484 = pneg %p99
        $region62: #{tpu_custom_call.1} parent=55 // pred_check_branch
          %486 = sbr.rel (%p484) target = $region64
        $region63: #{tpu_custom_call.1} parent=55 // pred_region
          %487 = dma.done %s480, 128
        $region64: #{tpu_custom_call.1} parent=55 // pred_fallthru
          _
        %s488 = sand.u32 %s36, 1
        %s489 = scalar_lea.sflag [#allocation6], %s488
        %s490 = sand.u32 %s114, 1
        %s491 = smul.addr %s490, 8
        %s492 = scalar_lea.vmem [#allocation7], %s491
        // Predicated region
        $region65: #{tpu_custom_call.1} parent=55 // pred_check
          %p493 = pneg %p127
        $region66: #{tpu_custom_call.1} parent=55 // pred_check_branch
          %495 = sbr.rel (%p493) target = $region68
        $region67: #{tpu_custom_call.1} parent=55 // pred_region
          %496 = dma.done %s489, 128
        $region68: #{tpu_custom_call.1} parent=55 // pred_fallthru
          _
        // Predicated region
        $region69: #{tpu_custom_call.1} parent=55 // pred_check
          %p497 = pneg %p148
        $region70: #{tpu_custom_call.1} parent=55 // pred_check_branch
          %499 = sbr.rel (%p497) target = $region72
        $region71: #{tpu_custom_call.1} parent=55 // pred_region
          %500 = dma.done [#allocation9], 256
        $region72: #{tpu_custom_call.1} parent=55 // pred_fallthru
          _
        // Predicated region
        $region73: #{tpu_custom_call.1} parent=55 // pred_check
          %p501 = pneg %p232
        $region74: #{tpu_custom_call.1} parent=55 // pred_check_branch
          %503 = sbr.rel (%p501) target = $region76
        $region75: #{tpu_custom_call.1} parent=55 // pred_region
          %504 = dma.done [#allocation9], 256
        $region76: #{tpu_custom_call.1} parent=55 // pred_fallthru
          _
        %s505 = sand.u32 %s58, 1
        %s506 = scalar_lea.sflag [#allocation3], %s505
        %s507 = sand.u32 %s58, 1
        %s508 = smul.addr %s507, 8
        %s509 = scalar_lea.vmem [#allocation2], %s508
        %p510 = pneg %p71
        %p511 = pneg %p68
        %s512 = sand.u32 %s36, 1
        %s513 = scalar_lea.sflag [#allocation6], %s512
        %s514 = sand.u32 %s86, 1
        %s515 = smul.addr %s514, 8
        %s516 = scalar_lea.vmem [#allocation5], %s515
        %p517 = pneg %p99
        %p518 = pneg %p96
        %s519 = sand.u32 %s36, 1
        %s520 = scalar_lea.sflag [#allocation6], %s519
        %s521 = sand.u32 %s114, 1
        %s522 = smul.addr %s521, 8
        %s523 = scalar_lea.vmem [#allocation7], %s522
        %p524 = pneg %p127
        %p525 = pneg %p124
        %p526 = pneg %p148
        %p527 = pneg %p145
        %p528 = pneg %p169
        %p529 = pneg %p166
        %p530 = pneg %p190
        %p531 = pneg %p187
        %p532 = pneg %p211
        %p533 = pneg %p208
        %p534 = pneg %p232
        %p535 = pneg %p229
        %p536 = pneg %p253
        %p537 = pneg %p250
        %p538 = pneg %p281
        %p539 = pneg %p278
        %s540 = sand.u32 %s268, 1
        %s541 = scalar_lea.sflag [#allocation4], %s540
        %s542 = sand.u32 %s268, 1
        %s543 = smul.addr %s542, 8
        %s544 = scalar_lea.vmem [#allocation11], %s543
        %p545 = pneg %p309
        %p546 = pneg %p306
        %s547 = sand.u32 %s36, 1
        %s548 = scalar_lea.sflag [#allocation13], %s547
        %s549 = sand.u32 %s296, 1
        %s550 = smul.addr %s549, 8
        %s551 = scalar_lea.vmem [#allocation12], %s550
        %p552 = pneg %p337
        %p553 = pneg %p334
        %s554 = sand.u32 %s36, 1
        %s555 = scalar_lea.sflag [#allocation13], %s554
        %s556 = sand.u32 %s324, 1
        %s557 = smul.addr %s556, 8
        %s558 = scalar_lea.vmem [#allocation14], %s557
        %s559 = smul.u32 2, %s41
        %s560 = smul.u32 2, %s41
        %s561 = smul.u32 2, %s41
        %s562 = smul.u32 2, %s41
        %s563 = smul.u32 2, %s41
        %s564 = smul.u32 2, %s41
        %v566 = vld [vmem:[%s474] sm:$0xf]
        %v567 = vld [vmem:[%s474 + $0x4] sm:$0xf]
        %v568 = vld [vmem:[#allocation8] sm:$0xf]
        %v569 = vld [vmem:[#allocation8 + $0x4] sm:$0xf]
        %v570 = vld [vmem:[#allocation8 + $0x8] sm:$0xf]
        %v571 = vld [vmem:[#allocation8 + $0xc] sm:$0xf]
        %v572 = vld [vmem:[%s4] sm:$0x1]
        %v574 = vlaneseq
        %v575 = vshrl.u32 %v574, 7
        %v576 = vsub.s32 0, %v575
        %v577 = vrot.slane %v572, %v576
        %v581 = vunpack.c.l.b16 %v566
        %v582 = vunpack.c.l.b16 %v567
        %v583 = vpack.c.b16 %v582, %v581
        %v588 = vunpack.c.l.b16 %v568
        %v589 = vunpack.c.l.b16 %v569
        %v590 = vunpack.c.l.b16 %v570
        %v591 = vunpack.c.l.b16 %v571
        %v592 = vpack.c.b16 %v589, %v588
        %v593 = vpack.c.b16 %v591, %v590
        %vm596 = vcmask 261120
        %v598 = vsel %vm596, %v583, 0
        %600 = vmatprep.subr.bf16.mxu0 0
        %601 = vmatpush1.bf16.msra.mxu0 %v592
        %602 = vmatprep.subr.bf16.mxu0 0
        %603 = vmatpush1.bf16.msra.mxu0 %v593
        %604 = vmatprep.subr.bf16.mxu0 0
        %605 = vmatpush1.bf16.msra.mxu0 0
        %606 = vmatprep.subr.bf16.mxu0 0
        %607 = vmatpush1.bf16.msra.mxu0 0
        %608 = vmatprep.subr.bf16.mxu0 0
        %609 = vmatpush1.bf16.msra.mxu0 0
        %610 = vmatprep.subr.bf16.mxu0 0
        %611 = vmatpush1.bf16.msra.mxu0 0
        %612 = vmatprep.subr.bf16.mxu0 0
        %613 = vmatpush1.bf16.msra.mxu0 0
        %614 = vmatprep.subr.bf16.mxu0 0
        %615 = vmatpush1.bf16.msra.mxu0 0
        %616 = vmatprep.subr.bf16.mxu0 0
        %617 = vmatpush1.bf16.msra.mxu0 0
        %618 = vmatprep.subr.bf16.mxu0 0
        %619 = vmatpush1.bf16.msra.mxu0 0
        %620 = vmatprep.subr.bf16.mxu0 0
        %621 = vmatpush1.bf16.msra.mxu0 0
        %622 = vmatprep.subr.bf16.mxu0 0
        %623 = vmatpush1.bf16.msra.mxu0 0
        %624 = vmatprep.subr.bf16.mxu0 0
        %625 = vmatpush1.bf16.msra.mxu0 0
        %626 = vmatprep.subr.bf16.mxu0 0
        %627 = vmatpush1.bf16.msra.mxu0 0
        %628 = vmatprep.subr.bf16.mxu0 0
        %629 = vmatpush1.bf16.msra.mxu0 0
        %630 = vmatprep.subr.bf16.mxu0 0
        %631 = vmatpush1.bf16.msra.mxu0 0
        %632 = vmatprep.mubr.bf16.mxu0 0
        %633 = vmatmul.mubr.bf16.gmra.mrb[0].mxu0 %v598
        %v634 = vpop.f32.mrb[0].mxu0
        %v635 = vadd.f32 %v577, %v634
        %v636 = vpop.f32.mrb[0].mxu0
        %v637 = vpop.f32.mrb[0].mxu0
        %v638 = vadd.f32 %v577, %v637
        %v639 = vpop.f32.mrb[0].mxu0
        %640 = vdwg.mxu0
        %v641 = vmax.f32 %v635, 0.0
        %v642 = vmax.f32 %v638, 0.0
        %v643 = vpack.c.bf16 %v642, %v641
        %v645 = vunpack.c.l.b16 %v643
        %v646 = vunpack.c.h.b16 %v643
        %v647 = vpack.c.b16 %v645, %v645
        %v648 = vpack.c.b16 %v646, %v646
        %651 = vst [vmem:[%s544] sm:$0xf] %v647
        %652 = vst [vmem:[%s544 + $0x4] sm:$0xf] %v648
        %v653 = vld [vmem:[%s483] sm:$0xf]
        %v654 = vld [vmem:[%s483 + $0x4] sm:$0xf]
        %v655 = vld [vmem:[%s5] sm:$0xf]
        %v656 = vld [vmem:[%s5 + $0x4] sm:$0xf]
        %v657 = vld [vmem:[%s5 + $0x8] sm:$0xf]
        %v658 = vld [vmem:[%s5 + $0xc] sm:$0xf]
        %v659 = vld [vmem:[%s6] sm:$0x1]
        %v661 = vlaneseq
        %v662 = vshrl.u32 %v661, 7
        %v663 = vsub.s32 0, %v662
        %v664 = vrot.slane %v659, %v663
        %v668 = vunpack.c.l.b16 %v653
        %v669 = vunpack.c.l.b16 %v654
        %v670 = vpack.c.b16 %v669, %v668
        %v675 = vunpack.c.l.b16 %v655
        %v676 = vunpack.c.l.b16 %v656
        %v677 = vunpack.c.l.b16 %v657
        %v678 = vunpack.c.l.b16 %v658
        %v679 = vpack.c.b16 %v676, %v675
        %v680 = vpack.c.b16 %v678, %v677
        %v684 = vsel %vm596, %v670, 0
        %686 = vmatprep.subr.bf16.mxu0 0
        %687 = vmatpush1.bf16.msra.mxu0 %v679
        %688 = vmatprep.subr.bf16.mxu0 0
        %689 = vmatpush1.bf16.msra.mxu0 %v680
        %690 = vmatprep.subr.bf16.mxu0 0
        %691 = vmatpush1.bf16.msra.mxu0 0
        %692 = vmatprep.subr.bf16.mxu0 0
        %693 = vmatpush1.bf16.msra.mxu0 0
        %694 = vmatprep.subr.bf16.mxu0 0
        %695 = vmatpush1.bf16.msra.mxu0 0
        %696 = vmatprep.subr.bf16.mxu0 0
        %697 = vmatpush1.bf16.msra.mxu0 0
        %698 = vmatprep.subr.bf16.mxu0 0
        %699 = vmatpush1.bf16.msra.mxu0 0
        %700 = vmatprep.subr.bf16.mxu0 0
        %701 = vmatpush1.bf16.msra.mxu0 0
        %702 = vmatprep.subr.bf16.mxu0 0
        %703 = vmatpush1.bf16.msra.mxu0 0
        %704 = vmatprep.subr.bf16.mxu0 0
        %705 = vmatpush1.bf16.msra.mxu0 0
        %706 = vmatprep.subr.bf16.mxu0 0
        %707 = vmatpush1.bf16.msra.mxu0 0
        %708 = vmatprep.subr.bf16.mxu0 0
        %709 = vmatpush1.bf16.msra.mxu0 0
        %710 = vmatprep.subr.bf16.mxu0 0
        %711 = vmatpush1.bf16.msra.mxu0 0
        %712 = vmatprep.subr.bf16.mxu0 0
        %713 = vmatpush1.bf16.msra.mxu0 0
        %714 = vmatprep.subr.bf16.mxu0 0
        %715 = vmatpush1.bf16.msra.mxu0 0
        %716 = vmatprep.subr.bf16.mxu0 0
        %717 = vmatpush1.bf16.msra.mxu0 0
        %718 = vmatprep.mubr.bf16.mxu0 0
        %719 = vmatmul.mubr.bf16.gmra.mrb[0].mxu0 %v684
        %v720 = vpop.f32.mrb[0].mxu0
        %v721 = vadd.f32 %v664, %v720
        %v722 = vpop.f32.mrb[0].mxu0
        %v723 = vpop.f32.mrb[0].mxu0
        %v724 = vadd.f32 %v664, %v723
        %v725 = vpop.f32.mrb[0].mxu0
        %726 = vdwg.mxu0
        %v727 = vmax.f32 %v721, 0.0
        %v728 = vmax.f32 %v724, 0.0
        %v729 = vpack.c.bf16 %v728, %v727
        %v731 = vunpack.c.l.b16 %v729
        %v732 = vunpack.c.h.b16 %v729
        %v733 = vpack.c.b16 %v731, %v731
        %v734 = vpack.c.b16 %v732, %v732
        %737 = vst [vmem:[%s551] sm:$0xf] %v733
        %738 = vst [vmem:[%s551 + $0x4] sm:$0xf] %v734
        %v739 = vld [vmem:[%s492] sm:$0xf]
        %v740 = vld [vmem:[%s492 + $0x4] sm:$0xf]
        %v741 = vld [vmem:[#allocation10] sm:$0xf]
        %v742 = vld [vmem:[#allocation10 + $0x4] sm:$0xf]
        %v743 = vld [vmem:[#allocation10 + $0x8] sm:$0xf]
        %v744 = vld [vmem:[#allocation10 + $0xc] sm:$0xf]
        %v745 = vld [vmem:[%s8] sm:$0x1]
        %v747 = vlaneseq
        %v748 = vshrl.u32 %v747, 7
        %v749 = vsub.s32 0, %v748
        %v750 = vrot.slane %v745, %v749
        %v754 = vunpack.c.l.b16 %v739
        %v755 = vunpack.c.l.b16 %v740
        %v756 = vpack.c.b16 %v755, %v754
        %v761 = vunpack.c.l.b16 %v741
        %v762 = vunpack.c.l.b16 %v742
        %v763 = vunpack.c.l.b16 %v743
        %v764 = vunpack.c.l.b16 %v744
        %v765 = vpack.c.b16 %v762, %v761
        %v766 = vpack.c.b16 %v764, %v763
        %v770 = vsel %vm596, %v756, 0
        %772 = vmatprep.subr.bf16.mxu0 0
        %773 = vmatpush1.bf16.msra.mxu0 %v765
        %774 = vmatprep.subr.bf16.mxu0 0
        %775 = vmatpush1.bf16.msra.mxu0 %v766
        %776 = vmatprep.subr.bf16.mxu0 0
        %777 = vmatpush1.bf16.msra.mxu0 0
        %778 = vmatprep.subr.bf16.mxu0 0
        %779 = vmatpush1.bf16.msra.mxu0 0
        %780 = vmatprep.subr.bf16.mxu0 0
        %781 = vmatpush1.bf16.msra.mxu0 0
        %782 = vmatprep.subr.bf16.mxu0 0
        %783 = vmatpush1.bf16.msra.mxu0 0
        %784 = vmatprep.subr.bf16.mxu0 0
        %785 = vmatpush1.bf16.msra.mxu0 0
        %786 = vmatprep.subr.bf16.mxu0 0
        %787 = vmatpush1.bf16.msra.mxu0 0
        %788 = vmatprep.subr.bf16.mxu0 0
        %789 = vmatpush1.bf16.msra.mxu0 0
        %790 = vmatprep.subr.bf16.mxu0 0
        %791 = vmatpush1.bf16.msra.mxu0 0
        %792 = vmatprep.subr.bf16.mxu0 0
        %793 = vmatpush1.bf16.msra.mxu0 0
        %794 = vmatprep.subr.bf16.mxu0 0
        %795 = vmatpush1.bf16.msra.mxu0 0
        %796 = vmatprep.subr.bf16.mxu0 0
        %797 = vmatpush1.bf16.msra.mxu0 0
        %798 = vmatprep.subr.bf16.mxu0 0
        %799 = vmatpush1.bf16.msra.mxu0 0
        %800 = vmatprep.subr.bf16.mxu0 0
        %801 = vmatpush1.bf16.msra.mxu0 0
        %802 = vmatprep.subr.bf16.mxu0 0
        %803 = vmatpush1.bf16.msra.mxu0 0
        %804 = vmatprep.mubr.bf16.mxu0 0
        %805 = vmatmul.mubr.bf16.gmra.mrb[0].mxu0 %v770
        %v806 = vpop.f32.mrb[0].mxu0
        %v807 = vadd.f32 %v750, %v806
        %v808 = vpop.f32.mrb[0].mxu0
        %v809 = vpop.f32.mrb[0].mxu0
        %v810 = vadd.f32 %v750, %v809
        %v811 = vpop.f32.mrb[0].mxu0
        %812 = vdwg.mxu0
        %v813 = vmax.f32 %v807, 0.0
        %v814 = vmax.f32 %v810, 0.0
        %v815 = vpack.c.bf16 %v814, %v813
        %v817 = vunpack.c.l.b16 %v815
        %v818 = vunpack.c.h.b16 %v815
        %v819 = vpack.c.b16 %v817, %v817
        %v820 = vpack.c.b16 %v818, %v818
        %823 = vst [vmem:[%s558] sm:$0xf] %v819
        %824 = vst [vmem:[%s558 + $0x4] sm:$0xf] %v820
        %s825 = sand.u32 %s268, 1
        %s826 = scalar_lea.sflag [#allocation4], %s825
        %s827 = sand.u32 %s268, 1
        %s828 = smul.addr %s827, 8
        %s829 = scalar_lea.vmem [#allocation11], %s828
        %s830 = sand.u32 %s36, 1
        %s831 = scalar_lea.sflag [#allocation13], %s830
        %s832 = sand.u32 %s296, 1
        %s833 = smul.addr %s832, 8
        %s834 = scalar_lea.vmem [#allocation12], %s833
        %s835 = sand.u32 %s36, 1
        %s836 = scalar_lea.sflag [#allocation13], %s835
        %s837 = sand.u32 %s324, 1
        %s838 = smul.addr %s837, 8
        %s839 = scalar_lea.vmem [#allocation14], %s838
        // Predicated region
        $region77: #{tpu_custom_call.1} parent=55 // pred_check
          %p840 = pneg %p278
        $region78: #{tpu_custom_call.1} parent=55 // pred_check_branch
          %842 = sbr.rel (%p840) target = $region80
        $region79: #{tpu_custom_call.1} parent=55 // pred_region
          %s843 = smul.u32 2, %s41
          %s845 = ssub.s32 128, 128
          %846 = vsyncadd %s826, %s845
          %s847 = smul.addr %s40, 2
          %s848 = sadd.s32 %s843, %s847
          %s849 = smul.addr %s848, 64
          %s850 = scalar_lea.hbm %s9, %s849
          %s851 = sshll.u32 %s829, 4
          %s852 = int_to_ptr.vmem [resolvable:$true] %s851
          %857 = dma.vmem_to_hbm [thread:$0]  %s852, 128, %s850, %s826, 64, 64, 4
        $region80: #{tpu_custom_call.1} parent=55 // pred_fallthru
          _
        // Predicated region
        $region81: #{tpu_custom_call.1} parent=55 // pred_check
          %p858 = pneg %p306
        $region82: #{tpu_custom_call.1} parent=55 // pred_check_branch
          %860 = sbr.rel (%p858) target = $region84
        $region83: #{tpu_custom_call.1} parent=55 // pred_region
          %s861 = smul.u32 2, %s41
          %s863 = ssub.s32 128, 128
          %864 = vsyncadd %s831, %s863
          %s865 = smul.addr %s40, 2
          %s866 = sadd.s32 %s861, %s865
          %s867 = smul.addr %s866, 64
          %s868 = scalar_lea.hbm %s10, %s867
          %s869 = sshll.u32 %s834, 4
          %s870 = int_to_ptr.vmem [resolvable:$true] %s869
          %875 = dma.vmem_to_hbm [thread:$0]  %s870, 128, %s868, %s831, 64, 64, 4
        $region84: #{tpu_custom_call.1} parent=55 // pred_fallthru
          _
        // Predicated region
        $region85: #{tpu_custom_call.1} parent=55 // pred_check
          %p876 = pneg %p334
        $region86: #{tpu_custom_call.1} parent=55 // pred_check_branch
          %878 = sbr.rel (%p876) target = $region88
        $region87: #{tpu_custom_call.1} parent=55 // pred_region
          %s879 = smul.u32 2, %s41
          %s881 = ssub.s32 128, 128
          %882 = vsyncadd %s836, %s881
          %s883 = smul.addr %s40, 2
          %s884 = sadd.s32 %s879, %s883
          %s885 = smul.addr %s884, 64
          %s886 = scalar_lea.hbm %s11, %s885
          %s887 = sshll.u32 %s839, 4
          %s888 = int_to_ptr.vmem [resolvable:$true] %s887
          %893 = dma.vmem_to_hbm [thread:$0]  %s888, 128, %s886, %s836, 64, 64, 4
        $region88: #{tpu_custom_call.1} parent=55 // pred_fallthru
          _
      $region56: #{tpu_custom_call.1} parent=5 // pred_fallthru
        _
      %p894 = scmp.le.s32.totalorder 2, %s31
      // Predicated region
      $region89: #{tpu_custom_call.1} parent=5 // pred_check
        %p895 = pneg %p894
      $region90: #{tpu_custom_call.1} parent=5 // pred_check_branch
        %897 = sbr.rel (%p895) target = $region92
      $region91: #{tpu_custom_call.1} parent=5 // pred_region
        %s898 = ssub.s32 %s31, 2
        // Predicated region
        $region93: #{tpu_custom_call.1} parent=91 // pred_check
          %p899 = pneg %p284
        $region94: #{tpu_custom_call.1} parent=91 // pred_check_branch
          %901 = sbr.rel (%p899) target = $region96
        $region95: #{tpu_custom_call.1} parent=91 // pred_region
          %s902 = sand.u32 %s269, 1
          %s903 = scalar_lea.sflag [#allocation4], %s902
          %s904 = sand.u32 %s269, 1
          %s905 = smul.addr %s904, 8
          %s906 = scalar_lea.vmem [#allocation11], %s905
          %907 = dma.done %s903, 128
        $region96: #{tpu_custom_call.1} parent=91 // pred_fallthru
          _
        // Predicated region
        $region97: #{tpu_custom_call.1} parent=91 // pred_check
          %p908 = pneg %p312
        $region98: #{tpu_custom_call.1} parent=91 // pred_check_branch
          %910 = sbr.rel (%p908) target = $region100
        $region99: #{tpu_custom_call.1} parent=91 // pred_region
          %s911 = sand.u32 %s37, 1
          %s912 = scalar_lea.sflag [#allocation13], %s911
          %s913 = sand.u32 %s297, 1
          %s914 = smul.addr %s913, 8
          %s915 = scalar_lea.vmem [#allocation12], %s914
          %916 = dma.done %s912, 128
        $region100: #{tpu_custom_call.1} parent=91 // pred_fallthru
          _
        // Predicated region
        $region101: #{tpu_custom_call.1} parent=91 // pred_check
          %p917 = pneg %p340
        $region102: #{tpu_custom_call.1} parent=91 // pred_check_branch
          %919 = sbr.rel (%p917) target = $region104
        $region103: #{tpu_custom_call.1} parent=91 // pred_region
          %s920 = sand.u32 %s37, 1
          %s921 = scalar_lea.sflag [#allocation13], %s920
          %s922 = sand.u32 %s325, 1
          %s923 = smul.addr %s922, 8
          %s924 = scalar_lea.vmem [#allocation14], %s923
          %925 = dma.done %s921, 128
        $region104: #{tpu_custom_call.1} parent=91 // pred_fallthru
          _
      $region92: #{tpu_custom_call.1} parent=5 // pred_fallthru
        _
    $region6: #{tpu_custom_call.1} parent=1 // loop_footer
      %s35 = sadd.s32 1, %s31
    $region7: #{tpu_custom_call.1} parent=1 // loop_footer_branch
      %30 = sbr.rel target = $region3
    $region8: #{tpu_custom_call.1} parent=1 // loop_exit
      _
    %926 = vsyncpa [#allocation3], 1
    %s927 = scalar_lea.sflag [#allocation3], 1
    %928 = vsyncpa %s927, 1
    %929 = vsyncpa [#allocation6], 1
    %s930 = scalar_lea.sflag [#allocation6], 1
    %931 = vsyncpa %s930, 1
    %932 = vsyncpa [#allocation9], 1
    %933 = vsyncpa [#allocation4], 1
    %s934 = scalar_lea.sflag [#allocation4], 1
    %935 = vsyncpa %s934, 1
    %936 = vsyncpa [#allocation13], 1
    %s937 = scalar_lea.sflag [#allocation13], 1
    %938 = vsyncpa %s937, 1

</llo_original>
